<compile_context>
chip_gen: v6e
topology: v6e:2x2x1
jax: 0.10.0
libtpu: 0.0.40
codegen_flags: <defaults>
</compile_context>

<pallas_src>
import functools

import jax
import jax.numpy as jnp
from jax import lax
from jax.experimental import pallas as pl
from jax.experimental.pallas import tpu as pltpu

_LANES = 128
# 2048 rows * 128 lanes * 4 B = 1 MiB per f32 block.  With double-buffered
# input + output that is ~4 MiB of VMEM -> safe on v5e (16 MiB scoped default),
# v6e/v7x (32 MiB scoped default), while big enough to amortize the ~0.35 us
# per-grid-step overhead and reach the HBM roofline.
_BLOCK_ROWS = 2048


def _round_up(a, b):
    return (a + b - 1) // b * b


def _uniform_bits24(idx, seed):
    """Counter-based hash: int32 element index + int32 seed -> 24 uniform bits.

    murmur3 fmix32 finalizer (full avalanche); int32 arithmetic wraps mod 2^32
    identically on TPU, in interpret mode, and in the host-side reference.
    """
    z = idx + seed * jnp.int32(-1640531527)        # 0x9E3779B9 (golden ratio)
    z = z ^ lax.shift_right_logical(z, 16)
    z = z * jnp.int32(-2048144789)                 # 0x85EBCA6B
    z = z ^ lax.shift_right_logical(z, 13)
    z = z * jnp.int32(-1028477387)                 # 0xC2B2AE35
    z = z ^ lax.shift_right_logical(z, 16)
    return lax.shift_right_logical(z, 8)           # top 24 bits -> [0, 2^24)


def _noise_kernel(scale, block_rows, seed_ref, x_ref, o_ref):
    # Global element index of every lane in this block (independent of tiling).
    i = pl.program_id(0)
    shape = x_ref.shape                            # (block_rows, 128)
    row = lax.broadcasted_iota(jnp.int32, shape, 0) + i * jnp.int32(block_rows)
    lane = lax.broadcasted_iota(jnp.int32, shape, 1)
    idx = row * jnp.int32(shape[1]) + lane

    bits24 = _uniform_bits24(idx, seed_ref[0])
    # Single fused multiply: scale = sigma / 2^24  ->  noise in [0, sigma).
    noise = bits24.astype(jnp.float32) * jnp.float32(scale)
    # Add in f32, cast once at the store (cheaper & more accurate for bf16).
    o_ref[...] = (x_ref[...].astype(jnp.float32) + noise).astype(o_ref.dtype)


def gaussian_noise_forward(x, seed, *, sigma=1.0, training=True):
    """Forward pass of GaussianNoise.  `x` is NCHW (or any shape)."""
    if (not training) or sigma == 0:
        return x

    orig_shape = x.shape
    n = x.size

    # Lane-dense 2-D slab (rows, 128).  Only pad if n is not a multiple of 128
    # (feature maps with W*H*C*N % 128 == 0 take the copy-free path).
    x_flat = x.reshape(-1)
    n_pad = _round_up(n, _LANES)
    if n_pad != n:
        x_flat = jnp.pad(x_flat, (0, n_pad - n))
    x2 = x_flat.reshape(-1, _LANES)
    rows = x2.shape[0]

    block_rows = min(_BLOCK_ROWS, _round_up(rows, 8))
    grid = (pl.cdiv(rows, block_rows),)

    seed_arr = jnp.asarray([seed], dtype=jnp.int32)
    scale = float(sigma) / float(1 << 24)

    kernel = functools.partial(_noise_kernel, scale, block_rows)

    out2 = pl.pallas_call(
        kernel,
        out_shape=jax.ShapeDtypeStruct((rows, _LANES), x.dtype),
        grid_spec=pltpu.PrefetchScalarGridSpec(
            num_scalar_prefetch=1,
            grid=grid,
            in_specs=[
                pl.BlockSpec((block_rows, _LANES), lambda i, seed_ref: (i, 0)),
            ],
            out_specs=pl.BlockSpec((block_rows, _LANES), lambda i, seed_ref: (i, 0)),
        ),
        compiler_params=pltpu.CompilerParams(
            # Elementwise + per-element counter RNG -> blocks are fully
            # independent; lets v7x shard the row axis across both TensorCores.
            dimension_semantics=("parallel",),
        ),
    )(seed_arr, x2)

    out_flat = out2.reshape(-1)
    if n_pad != n:
        out_flat = out_flat[:n]
    return out_flat.reshape(orig_shape)


if __name__ == "__main__":
    key = jax.random.PRNGKey(0)
    # Small NCHW input consistent with a GAN feature map: (batch=2, C=4, H=16, W=16)
    x = jax.random.normal(key, (2, 4, 16, 16), dtype=jnp.float32)

    sigma = 1.0
    seed = 0

    # Training mode: x + uniform[0, sigma) noise.
    y_train = jax.block_until_ready(
        gaussian_noise_forward(x, seed, sigma=sigma, training=True)
    )
    # Eval mode: identity.
    y_eval = jax.block_until_ready(
        gaussian_noise_forward(x, seed, sigma=sigma, training=False)
    )

    # Pure-JAX reference using the identical counter-based hash.
    n = x.size
    idx_ref = jnp.arange(n, dtype=jnp.int32)
    bits24_ref = _uniform_bits24(idx_ref, jnp.int32(seed))
    noise_ref = (
        bits24_ref.astype(jnp.float32) * jnp.float32(sigma / (1 << 24))
    ).reshape(x.shape)
    expected = x + noise_ref

    assert y_train.shape == x.shape and y_train.dtype == x.dtype
    assert bool(jnp.allclose(y_train, expected, rtol=0.0, atol=1e-6))
    delta = y_train - x
    assert bool(jnp.all(delta >= 0.0)) and bool(jnp.all(delta <= sigma))
    assert bool(jnp.array_equal(y_eval, x))

    print("KERNEL_OK")
</pallas_src>

<mosaic_0001>
module attributes {stable_mosaic.version = 11 : i64} {
  func.func @_noise_kernel(%arg0: i32, %arg1: memref<1xi32, #tpu.memory_space<smem>>, %arg2: memref<16x128xf32, #tpu.memory_space<vmem>>, %arg3: memref<16x128xf32, #tpu.memory_space<vmem>>) attributes {dimension_semantics = [#tpu.dimension_semantics<parallel>], iteration_bounds = array<i64: 1>, scalar_prefetch = 1 : i64, scratch_operands = 0 : i64, tpu.core_type = #tpu.core_type<tc>, window_params = [{transform_indices = @transform_0, window_bounds = array<i64: 16, 128>}, {transform_indices = @transform_1, window_bounds = array<i64: 16, 128>}]} {
    %0 = tpu.iota {dimensions = array<i32: 0>} : vector<16x128xi32>
    %c16_i32 = arith.constant 16 : i32
    %1 = arith.muli %arg0, %c16_i32 : i32
    %2 = vector.broadcast %1 : i32 to vector<16x128xi32>
    %3 = arith.addi %0, %2 : vector<16x128xi32>
    %4 = tpu.iota {dimensions = array<i32: 1>} : vector<16x128xi32>
    %c128_i32 = arith.constant 128 : i32
    %5 = vector.broadcast %c128_i32 : i32 to vector<16x128xi32>
    %6 = arith.muli %3, %5 : vector<16x128xi32>
    %7 = arith.addi %6, %4 : vector<16x128xi32>
    %c0 = arith.constant 0 : index
    %8 = memref.load %arg1[%c0] : memref<1xi32, #tpu.memory_space<smem>>
    %c-1640531527_i32 = arith.constant -1640531527 : i32
    %9 = arith.muli %8, %c-1640531527_i32 : i32
    %10 = vector.broadcast %9 : i32 to vector<16x128xi32>
    %11 = arith.addi %7, %10 : vector<16x128xi32>
    %c16_i32_0 = arith.constant 16 : i32
    %12 = vector.broadcast %c16_i32_0 : i32 to vector<16x128xi32>
    %13 = arith.shrui %11, %12 : vector<16x128xi32>
    %14 = arith.xori %11, %13 : vector<16x128xi32>
    %c-2048144789_i32 = arith.constant -2048144789 : i32
    %15 = vector.broadcast %c-2048144789_i32 : i32 to vector<16x128xi32>
    %16 = arith.muli %14, %15 : vector<16x128xi32>
    %c13_i32 = arith.constant 13 : i32
    %17 = vector.broadcast %c13_i32 : i32 to vector<16x128xi32>
    %18 = arith.shrui %16, %17 : vector<16x128xi32>
    %19 = arith.xori %16, %18 : vector<16x128xi32>
    %c-1028477387_i32 = arith.constant -1028477387 : i32
    %20 = vector.broadcast %c-1028477387_i32 : i32 to vector<16x128xi32>
    %21 = arith.muli %19, %20 : vector<16x128xi32>
    %c16_i32_1 = arith.constant 16 : i32
    %22 = vector.broadcast %c16_i32_1 : i32 to vector<16x128xi32>
    %23 = arith.shrui %21, %22 : vector<16x128xi32>
    %24 = arith.xori %21, %23 : vector<16x128xi32>
    %c8_i32 = arith.constant 8 : i32
    %25 = vector.broadcast %c8_i32 : i32 to vector<16x128xi32>
    %26 = arith.shrui %24, %25 : vector<16x128xi32>
    %27 = arith.sitofp %26 : vector<16x128xi32> to vector<16x128xf32>
    %cst = arith.constant 5.96046448E-8 : f32
    %28 = vector.broadcast %cst : f32 to vector<16x128xf32>
    %29 = arith.mulf %27, %28 : vector<16x128xf32>
    %c0_2 = arith.constant 0 : index
    %c0_3 = arith.constant 0 : index
    %30 = vector.load %arg2[%c0_2, %c0_3] : memref<16x128xf32, #tpu.memory_space<vmem>>, vector<16x128xf32>
    %31 = arith.addf %30, %29 : vector<16x128xf32>
    %c0_4 = arith.constant 0 : index
    %c0_5 = arith.constant 0 : index
    %32 = vector.load %arg3[%c0_4, %c0_5] : memref<16x128xf32, #tpu.memory_space<vmem>>, vector<16x128xf32>
    tpu.vector_store %arg3[%c0_4, %c0_5], %31 {strides = array<i32>} : memref<16x128xf32, #tpu.memory_space<vmem>>, vector<16x128xf32>,
    return
  }
  func.func @transform_0(%arg0: i32, %arg1: memref<1xi32, #tpu.memory_space<smem>>) -> (i32, i32) {
    %c0_i32 = arith.constant 0 : i32
    %c0_i32_0 = arith.constant 0 : i32
    return %arg0, %c0_i32 : i32, i32
  }
  func.func @transform_1(%arg0: i32, %arg1: memref<1xi32, #tpu.memory_space<smem>>) -> (i32, i32) {
    %c0_i32 = arith.constant 0 : i32
    %c0_i32_0 = arith.constant 0 : i32
    return %arg0, %c0_i32 : i32, i32
  }
}

</mosaic_0001>

<llo_original>
// kernel: tpu_custom_call.1
$region0: #{tpu_custom_call.1}
  #allocation0 [shape = 'u32[]', space=smem, size = 0x4, offset = 0x4, fixed_abs, tag = 'smem constant byte address 0x4 - core index']
  #allocation1 [shape = 'u32[144,128]{1,0:T(1,128)}', space=vmem, size = 0x12000, scoped, tag = 'internal scratch']
  #allocation2 [shape = 's32[1]{0}', space=sflag, size = 0x4, scoped, tag = 'scoped memory for tpu_custom_call.1']
  #allocation3 [shape = 's32[1]{0:T(128)S(6)}', space=smem, size = 0x200, scoped, tag = 'prefetched SMEM operand 0']
  %s0 = inlined_call_operand.<no memory space> [shape: s32[1], index: 0, kind: input, shape index: {}]
  %s1 = inlined_call_operand.hbm [shape: f32[16,128], index: 1, kind: input, shape index: {}]
  %s2 = inlined_call_operand.hbm [shape: f32[16,128], index: 2, kind: output, shape index: {}]
  %s3 = sld [smem:[#allocation0]]
  $region18: #{tpu_custom_call.1} parent=0
    _
  %s5 = ssub.s32 1, %s3
  %s6 = scalar_select 0, %s5, %s3
  %7 = sst [smem:[#allocation3]] %s0
  $region1: #{tpu_custom_call.1} parent=0
    #allocation4 [shape = 'u8[8192]{0}', space=vmem, size = 0x2000, scoped, tag = 'input window, operand 1, single buffered']
    #allocation5 [shape = 's32[1]{0}', space=sflag, size = 0x4, scoped, tag = 'scoped memory for tpu_custom_call.1']
    #allocation6 [shape = 's32[1]{0}', space=sflag, size = 0x4, scoped, tag = 'scoped memory for tpu_custom_call.1']
    #allocation7 [shape = 'u8[8192]{0}', space=vmem, size = 0x2000, scoped, tag = 'output window, operand 0, single buffered']
    %8 = vsyncpa [#allocation5], 0
    %9 = vsyncpa [#allocation6], 0
    // Predicated region
    $region2: #{tpu_custom_call.1} parent=1 // pred_check
      _
    $region3: #{tpu_custom_call.1} parent=1 // pred_check_branch
      %11 = sbr.rel (0) target = $region5
    $region4: #{tpu_custom_call.1} parent=1 // pred_region
      %s13 = ssub.s32 256, 256
      %14 = vsyncadd [#allocation5], %s13
      %s15 = sshll.u32 [#allocation4], 4
      %s16 = int_to_ptr.vmem [resolvable:$true] %s15
      %21 = dma.hbm_to_vmem [thread:$0]  %s1, 256, %s16, [#allocation5], 128, 128, 8
    $region5: #{tpu_custom_call.1} parent=1 // pred_fallthru
      _
    // Predicated region
    $region6: #{tpu_custom_call.1} parent=1 // pred_check
      _
    $region7: #{tpu_custom_call.1} parent=1 // pred_check_branch
      %23 = sbr.rel (0) target = $region9
    $region8: #{tpu_custom_call.1} parent=1 // pred_region
      %24 = dma.done [#allocation5], 256
    $region9: #{tpu_custom_call.1} parent=1 // pred_fallthru
      _
    %v25 = vlaneseq
    %v26 = vshrl.u32 %v25, 7
    %v27 = vadd.s32 %v26, 8
    %s28 = smul.u32 0, 16
    %v29 = vstv %s28
    %v30 = vadd.s32 %v26, %v29
    %v31 = vadd.s32 %v27, %v29
    %v32 = vlaneseq
    %v33 = vand.u32 %v32, 127
    %v34 = vmul.u32 %v30, 128
    %v35 = vmul.u32 %v31, 128
    %v36 = vadd.s32 %v34, %v33
    %v37 = vadd.s32 %v35, %v33
    %s38 = sld [smem:[#allocation3]]
    %s39 = smul.u32 %s38, 2654435769
    %v40 = vstv %s39
    %v41 = vadd.s32 %v36, %v40
    %v42 = vadd.s32 %v37, %v40
    %v43 = vshrl.u32 %v41, 16
    %v44 = vshrl.u32 %v42, 16
    %v45 = vxor.u32 %v41, %v43
    %v46 = vxor.u32 %v42, %v44
    %v47 = vmul.u32 %v45, 2246822507
    %v48 = vmul.u32 %v46, 2246822507
    %v49 = vshrl.u32 %v47, 13
    %v50 = vshrl.u32 %v48, 13
    %v51 = vxor.u32 %v47, %v49
    %v52 = vxor.u32 %v48, %v50
    %v53 = vmul.u32 %v51, 3266489909
    %v54 = vmul.u32 %v52, 3266489909
    %v55 = vshrl.u32 %v53, 16
    %v56 = vshrl.u32 %v54, 16
    %v57 = vxor.u32 %v53, %v55
    %v58 = vxor.u32 %v54, %v56
    %v59 = vshrl.u32 %v57, 8
    %v60 = vshrl.u32 %v58, 8
    %v61 = vcvt.s32.f32 %v59
    %v62 = vcvt.s32.f32 %v60
    %v63 = vmul.f32 %v61, 5.9604645e-08
    %v64 = vmul.f32 %v62, 5.9604645e-08
    %v65 = vld [vmem:[#allocation4] sm:$0xff]
    %v66 = vld [vmem:[#allocation4 + $0x8] sm:$0xff]
    %v67 = vadd.f32 %v65, %v63
    %v68 = vadd.f32 %v66, %v64
    %69 = vst [vmem:[#allocation7] sm:$0xff] %v67
    %70 = vst [vmem:[#allocation7 + $0x8] sm:$0xff] %v68
    // Predicated region
    $region10: #{tpu_custom_call.1} parent=1 // pred_check
      _
    $region11: #{tpu_custom_call.1} parent=1 // pred_check_branch
      %72 = sbr.rel (0) target = $region13
    $region12: #{tpu_custom_call.1} parent=1 // pred_region
      %s74 = ssub.s32 256, 256
      %75 = vsyncadd [#allocation6], %s74
      %s76 = sshll.u32 [#allocation7], 4
      %s77 = int_to_ptr.vmem [resolvable:$true] %s76
      %82 = dma.vmem_to_hbm [thread:$0]  %s77, 256, %s2, [#allocation6], 128, 128, 8
    $region13: #{tpu_custom_call.1} parent=1 // pred_fallthru
      _
    // Predicated region
    $region14: #{tpu_custom_call.1} parent=1 // pred_check
      _
    $region15: #{tpu_custom_call.1} parent=1 // pred_check_branch
      %84 = sbr.rel (0) target = $region17
    $region16: #{tpu_custom_call.1} parent=1 // pred_region
      %85 = dma.done [#allocation6], 256
    $region17: #{tpu_custom_call.1} parent=1 // pred_fallthru
      _
    %86 = vsyncpa [#allocation5], 1
    %87 = vsyncpa [#allocation6], 1

</llo_original>
